<compile_context>
chip_gen: v7x
topology: tpu7x:2x2x1
jax: 0.10.0
libtpu: 0.0.40
codegen_flags: <defaults>
</compile_context>

<pallas_src>
import functools

import jax
import jax.numpy as jnp
from jax.experimental import pallas as pl
from jax.experimental.pallas import tpu as pltpu


MFCC_DIM = 40
TEXT_DIM = 768
HIDDEN_DIM = 256
HALF_DIM = HIDDEN_DIM // 2        # 128
OUT_DIM = 2
OUT_PAD = 128                     # lane-dense padded output width


def _round_up(x, m):
    return (x + m - 1) // m * m


def _cdiv(a, b):
    return (a + b - 1) // b


def audio_analysis_kernel(mfcc_ref, text_ref, wm_ref, wt_ref, bc_ref,
                          w1_ref, b1_ref, w2_ref, b2_ref, out_ref):
    wdt = wm_ref.dtype  # MXU operand dtype (f32 or bf16); accumulation is f32.

    # combined = (mfcc @ Wm + bm + text @ Wt + bt) / 2, with the 0.5 and both
    # biases folded into wm/wt/bc on the host -> two MXU matmuls + one bias add.
    combined = (
        jnp.dot(mfcc_ref[...].astype(wdt), wm_ref[...],
                preferred_element_type=jnp.float32)
        + jnp.dot(text_ref[...].astype(wdt), wt_ref[...],
                  preferred_element_type=jnp.float32)
        + bc_ref[...]
    )

    # output MLP: Linear -> ReLU -> Linear (zero-padded to 128 lanes) -> Sigmoid*10
    h = jnp.dot(combined.astype(wdt), w1_ref[...],
                preferred_element_type=jnp.float32) + b1_ref[...]
    h = jnp.maximum(h, 0.0)

    logits = jnp.dot(h.astype(wdt), w2_ref[...],
                     preferred_element_type=jnp.float32) + b2_ref[...]

    out_ref[...] = (jax.nn.sigmoid(logits) * 10.0).astype(out_ref.dtype)


def pack_params(p, compute_dtype=jnp.bfloat16):
    """One-time host-side folding of the PyTorch-layout parameters.

    p holds pre-transposed weights ([in, out]) and row biases ([1, out]).
    compute_dtype is the MXU operand dtype (bf16 is native on v5e/v6e/v7x);
    biases and all elementwise math stay f32 inside the kernel.
    """
    wm = (p["wm"] * 0.5).astype(compute_dtype)                   # [40, 256]
    wt = (p["wt"] * 0.5).astype(compute_dtype)                   # [768, 256]
    bc = ((p["bm"] + p["bt"]) * 0.5).astype(jnp.float32)         # [1, 256]
    w2p = jnp.zeros((HALF_DIM, OUT_PAD), jnp.float32).at[:, :OUT_DIM].set(p["w2"])
    b2p = jnp.zeros((1, OUT_PAD), jnp.float32).at[:, :OUT_DIM].set(p["b2"])
    return dict(
        wm=wm, wt=wt, bc=bc,
        w1=p["w1"].astype(compute_dtype),
        b1=p["b1"].astype(jnp.float32),
        w2=w2p.astype(compute_dtype),
        b2=b2p.astype(jnp.float32),
    )


def _row_block_spec(tm, cols, depth):
    """Batch-tiled input spec; 3-deep pipelining when the grid is long."""
    if depth > 2:
        try:
            return pl.BlockSpec((tm, cols), lambda i: (i, 0),
                                pipeline_mode=pl.Buffered(depth))
        except (AttributeError, TypeError):
            pass  # older JAX without pipeline_mode / Buffered -> default 2-deep
    return pl.BlockSpec((tm, cols), lambda i: (i, 0))


@functools.partial(jax.jit, static_argnames=("block_rows",))
def audio_analysis_forward(mfcc_features, text_features, packed, block_rows=1024):
    B = mfcc_features.shape[0]
    compute_dtype = jnp.dtype(packed["wm"].dtype)
    # Sublane pack: 16 rows per vreg group for bf16 operands, 8 for f32.
    sublane = 16 if compute_dtype.itemsize < 4 else 8

    # Balanced batch tiling: pad only to the sublane pack per tile (not to a
    # full tile multiple), and force >=2 grid steps for large batches so the
    # "parallel" axis shards across both v7x TensorCores.
    b_aln = _round_up(max(B, 1), sublane)
    n = _cdiv(b_aln, block_rows)
    if n == 1 and b_aln >= 256:
        n = 2
    tm = _round_up(_cdiv(b_aln, n), sublane)
    b_pad = n * tm

    mfcc = mfcc_features
    text = text_features
    if b_pad != B:  # zero-fill the ragged tail rows (never OOB-read garbage)
        mfcc = jnp.pad(mfcc, ((0, b_pad - B), (0, 0)))
        text = jnp.pad(text, ((0, b_pad - B), (0, 0)))

    def const_spec(shape):  # weights / biases: VMEM-resident across grid steps
        return pl.BlockSpec(shape, lambda i: (0, 0))

    # Store padded output in the compute dtype (bf16 halves the mostly-dead
    # 128-lane writeback); wrapper slices [:, :2] and upcasts.
    out_dtype = jnp.bfloat16 if compute_dtype.itemsize < 4 else jnp.float32

    out = pl.pallas_call(
        audio_analysis_kernel,
        grid=(n,),
        in_specs=[
            _row_block_spec(tm, MFCC_DIM, 3 if n >= 3 else 2),
            _row_block_spec(tm, TEXT_DIM, 3 if n >= 3 else 2),
            const_spec(packed["wm"].shape),
            const_spec(packed["wt"].shape),
            const_spec(packed["bc"].shape),
            const_spec(packed["w1"].shape),
            const_spec(packed["b1"].shape),
            const_spec(packed["w2"].shape),
            const_spec(packed["b2"].shape),
        ],
        out_specs=pl.BlockSpec((tm, OUT_PAD), lambda i: (i, 0)),
        out_shape=jax.ShapeDtypeStruct((b_pad, OUT_PAD), out_dtype),
        compiler_params=pltpu.CompilerParams(
            dimension_semantics=("parallel",),        # megacore-shardable batch
            vmem_limit_bytes=48 * 1024 * 1024,        # < v7x 64 MiB physical
        ),
    )(mfcc, text, packed["wm"], packed["wt"], packed["bc"],
      packed["w1"], packed["b1"], packed["w2"], packed["b2"])

    return out[:B, :OUT_DIM].astype(jnp.float32)


def init_params(key):
    """Deterministic synthetic parameters (PyTorch-style uniform fan-in init)."""
    def linear_params(key, fan_in, fan_out):
        kw, kb = jax.random.split(key)
        bound = 1.0 / jnp.sqrt(fan_in)
        w = jax.random.uniform(kw, (fan_in, fan_out), jnp.float32, -bound, bound)
        b = jax.random.uniform(kb, (1, fan_out), jnp.float32, -bound, bound)
        return w, b

    k0, k1, k2, k3 = jax.random.split(key, 4)
    wm, bm = linear_params(k0, MFCC_DIM, HIDDEN_DIM)
    wt, bt = linear_params(k1, TEXT_DIM, HIDDEN_DIM)
    w1, b1 = linear_params(k2, HIDDEN_DIM, HALF_DIM)
    w2, b2 = linear_params(k3, HALF_DIM, OUT_DIM)
    return dict(wm=wm, bm=bm, wt=wt, bt=bt, w1=w1, b1=b1, w2=w2, b2=b2)


def reference_forward(mfcc_features, text_features, p):
    """Pure-JAX f32 reference of the PyTorch forward (unfolded params)."""
    mfcc = mfcc_features @ p["wm"] + p["bm"]
    text = text_features @ p["wt"] + p["bt"]
    combined = (mfcc + text) / 2.0
    h = jnp.maximum(combined @ p["w1"] + p["b1"], 0.0)
    return jax.nn.sigmoid(h @ p["w2"] + p["b2"]) * 10.0


if __name__ == "__main__":
    key = jax.random.PRNGKey(0)
    k_params, k_mfcc, k_text = jax.random.split(key, 3)

    params = init_params(k_params)
    packed_f32 = pack_params(params, jnp.float32)
    packed_bf16 = pack_params(params, jnp.bfloat16)

    # --- small batch: single-tile path -------------------------------------
    B = 8
    mfcc_features = jax.random.normal(k_mfcc, (B, MFCC_DIM), jnp.float32)
    text_features = jax.random.normal(k_text, (B, TEXT_DIM), jnp.float32)
    ref = reference_forward(mfcc_features, text_features, params)

    out = jax.block_until_ready(
        audio_analysis_forward(mfcc_features, text_features, packed_f32))
    assert out.shape == (B, OUT_DIM)
    assert jnp.allclose(out, ref, atol=1e-4, rtol=1e-4), "f32 mismatch vs reference"

    out_bf16 = jax.block_until_ready(
        audio_analysis_forward(mfcc_features, text_features, packed_bf16))
    assert out_bf16.shape == (B, OUT_DIM)
    assert jnp.allclose(out_bf16, ref, atol=0.25, rtol=0.05), "bf16 mismatch vs reference"

    # --- larger batch: multi-tile grid, ragged-batch padding, bf16 path -----
    B2 = 160
    k_m2, k_t2 = jax.random.split(jax.random.PRNGKey(1))
    mfcc2 = jax.random.normal(k_m2, (B2, MFCC_DIM), jnp.float32)
    text2 = jax.random.normal(k_t2, (B2, TEXT_DIM), jnp.float32)
    ref2 = reference_forward(mfcc2, text2, params)

    out2 = jax.block_until_ready(
        audio_analysis_forward(mfcc2, text2, packed_bf16, block_rows=64))
    assert out2.shape == (B2, OUT_DIM)
    assert jnp.allclose(out2, ref2, atol=0.25, rtol=0.05), "tiled bf16 mismatch vs reference"

    print("KERNEL_OK")
</pallas_src>

<mosaic_0001>
module attributes {stable_mosaic.version = 11 : i64} {
  func.func @audio_analysis_kernel(%arg0: i32, %arg1: memref<8x40xf32, #tpu.memory_space<vmem>>, %arg2: memref<8x768xf32, #tpu.memory_space<vmem>>, %arg3: memref<40x256xf32, #tpu.memory_space<vmem>>, %arg4: memref<768x256xf32, #tpu.memory_space<vmem>>, %arg5: memref<1x256xf32, #tpu.memory_space<vmem>>, %arg6: memref<256x128xf32, #tpu.memory_space<vmem>>, %arg7: memref<1x128xf32, #tpu.memory_space<vmem>>, %arg8: memref<128x128xf32, #tpu.memory_space<vmem>>, %arg9: memref<1x128xf32, #tpu.memory_space<vmem>>, %arg10: memref<8x128xf32, #tpu.memory_space<vmem>>) attributes {dimension_semantics = [#tpu.dimension_semantics<parallel>], iteration_bounds = array<i64: 1>, scalar_prefetch = 0 : i64, scratch_operands = 0 : i64, tpu.core_type = #tpu.core_type<tc>, window_params = [{transform_indices = @transform_0, window_bounds = array<i64: 8, 40>}, {transform_indices = @transform_1, window_bounds = array<i64: 8, 768>}, {pipeline_mode = #tpu.pipeline_mode<synchronous>, transform_indices = @transform_2, window_bounds = array<i64: 40, 256>}, {pipeline_mode = #tpu.pipeline_mode<synchronous>, transform_indices = @transform_3, window_bounds = array<i64: 768, 256>}, {pipeline_mode = #tpu.pipeline_mode<synchronous>, transform_indices = @transform_4, window_bounds = array<i64: 1, 256>}, {pipeline_mode = #tpu.pipeline_mode<synchronous>, transform_indices = @transform_5, window_bounds = array<i64: 256, 128>}, {pipeline_mode = #tpu.pipeline_mode<synchronous>, transform_indices = @transform_6, window_bounds = array<i64: 1, 128>}, {pipeline_mode = #tpu.pipeline_mode<synchronous>, transform_indices = @transform_7, window_bounds = array<i64: 128, 128>}, {pipeline_mode = #tpu.pipeline_mode<synchronous>, transform_indices = @transform_8, window_bounds = array<i64: 1, 128>}, {transform_indices = @transform_9, window_bounds = array<i64: 8, 128>}]} {
    %c0 = arith.constant 0 : index
    %c0_0 = arith.constant 0 : index
    %0 = vector.load %arg1[%c0, %c0_0] : memref<8x40xf32, #tpu.memory_space<vmem>>, vector<8x40xf32>
    %c0_1 = arith.constant 0 : index
    %c0_2 = arith.constant 0 : index
    %1 = vector.load %arg3[%c0_1, %c0_2] : memref<40x256xf32, #tpu.memory_space<vmem>>, vector<40x256xf32>
    %cst = arith.constant dense<0.000000e+00> : vector<8x256xf32>
    %2 = tpu.matmul %0, %1, %cst {dimension_numbers = #tpu.dot_dimension_numbers<[1], [0], [0], [1], [0, 0, 1, 1], [], []>} : vector<8x40xf32>, vector<40x256xf32>, vector<8x256xf32> -> vector<8x256xf32>
    %c0_3 = arith.constant 0 : index
    %c0_4 = arith.constant 0 : index
    %3 = vector.load %arg2[%c0_3, %c0_4] : memref<8x768xf32, #tpu.memory_space<vmem>>, vector<8x768xf32>
    %c0_5 = arith.constant 0 : index
    %c0_6 = arith.constant 0 : index
    %4 = vector.load %arg4[%c0_5, %c0_6] : memref<768x256xf32, #tpu.memory_space<vmem>>, vector<768x256xf32>
    %cst_7 = arith.constant dense<0.000000e+00> : vector<8x256xf32>
    %5 = tpu.matmul %3, %4, %cst_7 {dimension_numbers = #tpu.dot_dimension_numbers<[1], [0], [0], [1], [0, 0, 1, 1], [], []>} : vector<8x768xf32>, vector<768x256xf32>, vector<8x256xf32> -> vector<8x256xf32>
    %6 = arith.addf %2, %5 : vector<8x256xf32>
    %c0_8 = arith.constant 0 : index
    %c0_9 = arith.constant 0 : index
    %7 = vector.load %arg5[%c0_8, %c0_9] : memref<1x256xf32, #tpu.memory_space<vmem>>, vector<1x256xf32>
    %8 = vector.broadcast %7 : vector<1x256xf32> to vector<8x256xf32>
    %9 = arith.addf %6, %8 : vector<8x256xf32>
    %c0_10 = arith.constant 0 : index
    %c0_11 = arith.constant 0 : index
    %10 = vector.load %arg6[%c0_10, %c0_11] : memref<256x128xf32, #tpu.memory_space<vmem>>, vector<256x128xf32>
    %cst_12 = arith.constant dense<0.000000e+00> : vector<8x128xf32>
    %11 = tpu.matmul %9, %10, %cst_12 {dimension_numbers = #tpu.dot_dimension_numbers<[1], [0], [0], [1], [0, 0, 1, 1], [], []>} : vector<8x256xf32>, vector<256x128xf32>, vector<8x128xf32> -> vector<8x128xf32>
    %c0_13 = arith.constant 0 : index
    %c0_14 = arith.constant 0 : index
    %12 = vector.load %arg7[%c0_13, %c0_14] : memref<1x128xf32, #tpu.memory_space<vmem>>, vector<1x128xf32>
    %13 = vector.broadcast %12 : vector<1x128xf32> to vector<8x128xf32>
    %14 = arith.addf %11, %13 : vector<8x128xf32>
    %cst_15 = arith.constant 0.000000e+00 : f32
    %15 = vector.broadcast %cst_15 : f32 to vector<8x128xf32>
    %16 = arith.maximumf %14, %15 : vector<8x128xf32>
    %c0_16 = arith.constant 0 : index
    %c0_17 = arith.constant 0 : index
    %17 = vector.load %arg8[%c0_16, %c0_17] : memref<128x128xf32, #tpu.memory_space<vmem>>, vector<128x128xf32>
    %cst_18 = arith.constant dense<0.000000e+00> : vector<8x128xf32>
    %18 = tpu.matmul %16, %17, %cst_18 {dimension_numbers = #tpu.dot_dimension_numbers<[1], [0], [0], [1], [0, 0, 1, 1], [], []>} : vector<8x128xf32>, vector<128x128xf32>, vector<8x128xf32> -> vector<8x128xf32>
    %c0_19 = arith.constant 0 : index
    %c0_20 = arith.constant 0 : index
    %19 = vector.load %arg9[%c0_19, %c0_20] : memref<1x128xf32, #tpu.memory_space<vmem>>, vector<1x128xf32>
    %20 = vector.broadcast %19 : vector<1x128xf32> to vector<8x128xf32>
    %21 = arith.addf %18, %20 : vector<8x128xf32>
    %22 = arith.negf %21 : vector<8x128xf32>
    %23 = math.exp %22 : vector<8x128xf32>
    %cst_21 = arith.constant 1.000000e+00 : f32
    %24 = vector.broadcast %cst_21 : f32 to vector<8x128xf32>
    %25 = arith.addf %24, %23 : vector<8x128xf32>
    %26 = arith.divf %24, %25 : vector<8x128xf32>
    %cst_22 = arith.constant 1.000000e+01 : f32
    %27 = vector.broadcast %cst_22 : f32 to vector<8x128xf32>
    %28 = arith.mulf %26, %27 : vector<8x128xf32>
    %c0_23 = arith.constant 0 : index
    %c0_24 = arith.constant 0 : index
    %29 = vector.load %arg10[%c0_23, %c0_24] : memref<8x128xf32, #tpu.memory_space<vmem>>, vector<8x128xf32>
    tpu.vector_store %arg10[%c0_23, %c0_24], %28 {strides = array<i32>} : memref<8x128xf32, #tpu.memory_space<vmem>>, vector<8x128xf32>,
    return
  }
  func.func @transform_0(%arg0: i32) -> (i32, i32) {
    %c0_i32 = arith.constant 0 : i32
    %c0_i32_0 = arith.constant 0 : i32
    return %arg0, %c0_i32 : i32, i32
  }
  func.func @transform_1(%arg0: i32) -> (i32, i32) {
    %c0_i32 = arith.constant 0 : i32
    %c0_i32_0 = arith.constant 0 : i32
    return %arg0, %c0_i32 : i32, i32
  }
  func.func @transform_2(%arg0: i32) -> (i32, i32) {
    %c0_i32 = arith.constant 0 : i32
    %c0_i32_0 = arith.constant 0 : i32
    %c0_i32_1 = arith.constant 0 : i32
    return %c0_i32, %c0_i32_0 : i32, i32
  }
  func.func @transform_3(%arg0: i32) -> (i32, i32) {
    %c0_i32 = arith.constant 0 : i32
    %c0_i32_0 = arith.constant 0 : i32
    %c0_i32_1 = arith.constant 0 : i32
    return %c0_i32, %c0_i32_0 : i32, i32
  }
  func.func @transform_4(%arg0: i32) -> (i32, i32) {
    %c0_i32 = arith.constant 0 : i32
    %c0_i32_0 = arith.constant 0 : i32
    %c0_i32_1 = arith.constant 0 : i32
    return %c0_i32, %c0_i32_0 : i32, i32
  }
  func.func @transform_5(%arg0: i32) -> (i32, i32) {
    %c0_i32 = arith.constant 0 : i32
    %c0_i32_0 = arith.constant 0 : i32
    %c0_i32_1 = arith.constant 0 : i32
    return %c0_i32, %c0_i32_0 : i32, i32
  }
  func.func @transform_6(%arg0: i32) -> (i32, i32) {
    %c0_i32 = arith.constant 0 : i32
    %c0_i32_0 = arith.constant 0 : i32
    %c0_i32_1 = arith.constant 0 : i32
    return %c0_i32, %c0_i32_0 : i32, i32
  }
  func.func @transform_7(%arg0: i32) -> (i32, i32) {
    %c0_i32 = arith.constant 0 : i32
    %c0_i32_0 = arith.constant 0 : i32
    %c0_i32_1 = arith.constant 0 : i32
    return %c0_i32, %c0_i32_0 : i32, i32
  }
  func.func @transform_8(%arg0: i32) -> (i32, i32) {
    %c0_i32 = arith.constant 0 : i32
    %c0_i32_0 = arith.constant 0 : i32
    %c0_i32_1 = arith.constant 0 : i32
    return %c0_i32, %c0_i32_0 : i32, i32
  }
  func.func @transform_9(%arg0: i32) -> (i32, i32) {
    %c0_i32 = arith.constant 0 : i32
    %c0_i32_0 = arith.constant 0 : i32
    return %arg0, %c0_i32 : i32, i32
  }
}

</mosaic_0001>

<llo_original>
// kernel: audio_analysis_forward.1
$region0: #{audio_analysis_forward.1}
  #allocation0 [shape = 'u32[]', space=smem, size = 0x4, offset = 0x4, fixed_abs, tag = 'smem constant byte address 0x4 - core index']
  #allocation1 [shape = 'u32[144,128]{1,0:T(1,128)}', space=vmem, size = 0x12000, scoped, tag = 'internal scratch']
  %s0 = inlined_call_operand.hbm [shape: f32[8,40], index: 0, kind: input, shape index: {}]
  %s1 = inlined_call_operand.hbm [shape: f32[8,768], index: 1, kind: input, shape index: {}]
  %s2 = inlined_call_operand.hbm [shape: f32[40,256], index: 2, kind: input, shape index: {}]
  %s3 = inlined_call_operand.hbm [shape: f32[768,256], index: 3, kind: input, shape index: {}]
  %s4 = inlined_call_operand.vmem [shape: f32[1,256], index: 4, kind: input, shape index: {}]
  %s5 = inlined_call_operand.hbm [shape: f32[256,128], index: 5, kind: input, shape index: {}]
  %s6 = inlined_call_operand.vmem [shape: f32[1,128], index: 6, kind: input, shape index: {}]
  %s7 = inlined_call_operand.hbm [shape: f32[128,128], index: 7, kind: input, shape index: {}]
  %s8 = inlined_call_operand.vmem [shape: f32[1,128], index: 8, kind: input, shape index: {}]
  %s9 = inlined_call_operand.vmem [shape: f32[8,128], index: 9, kind: output, shape index: {}]
  %s10 = sld [smem:[#allocation0]]
  $region70: #{audio_analysis_forward.1} parent=0
    _
  %s12 = ssub.s32 1, %s10
  %s13 = scalar_select 0, %s12, %s10
  $region1: #{audio_analysis_forward.1} parent=0
    #allocation2 [shape = 'u8[4096]{0}', space=vmem, size = 0x1000, scoped, tag = 'input window, operand 0, single buffered']
    #allocation3 [shape = 's32[1]{0}', space=sflag, size = 0x4, scoped, tag = 'scoped memory for audio_analysis_forward.1']
    #allocation4 [shape = 'u8[24576]{0}', space=vmem, size = 0x6000, scoped, tag = 'input window, operand 1, single buffered']
    #allocation5 [shape = 's32[1]{0}', space=sflag, size = 0x4, scoped, tag = 'scoped memory for audio_analysis_forward.1']
    #allocation6 [shape = 'u8[40960]{0}', space=vmem, size = 0xa000, scoped, tag = 'input window, operand 2, single buffered']
    #allocation7 [shape = 'u8[786432]{0}', space=vmem, size = 0xc0000, scoped, tag = 'input window, operand 3, single buffered']
    #allocation8 [shape = 's32[1]{0}', space=sflag, size = 0x4, scoped, tag = 'scoped memory for audio_analysis_forward.1']
    #allocation9 [shape = 'u8[131072]{0}', space=vmem, size = 0x20000, scoped, tag = 'input window, operand 5, single buffered']
    #allocation10 [shape = 'u8[65536]{0}', space=vmem, size = 0x10000, scoped, tag = 'input window, operand 7, single buffered']
    #allocation11 [shape = 's32[1]{0}', space=sflag, size = 0x4, scoped, tag = 'scoped memory for audio_analysis_forward.1']
    %14 = vsyncpa [#allocation3], 0
    %15 = vsyncpa [#allocation5], 0
    %16 = vsyncpa [#allocation8], 0
    %17 = vsyncpa [#allocation11], 0
    // Predicated region
    $region2: #{audio_analysis_forward.1} parent=1 // pred_check
      _
    $region3: #{audio_analysis_forward.1} parent=1 // pred_check_branch
      %19 = sbr.rel (0) target = $region5
    $region4: #{audio_analysis_forward.1} parent=1 // pred_region
      %s21 = ssub.s32 128, 128
      %22 = vsyncadd [#allocation3], %s21
      %s24 = sshll.u32 [#allocation2], 4
      %s25 = int_to_ptr.vmem [resolvable:$true] %s24
      %27 = dma.hbm_to_vmem [thread:$0]  %s0, 128, %s25, [#allocation3]
    $region5: #{audio_analysis_forward.1} parent=1 // pred_fallthru
      _
    // Predicated region
    $region6: #{audio_analysis_forward.1} parent=1 // pred_check
      _
    $region7: #{audio_analysis_forward.1} parent=1 // pred_check_branch
      %29 = sbr.rel (0) target = $region9
    $region8: #{audio_analysis_forward.1} parent=1 // pred_region
      %s31 = ssub.s32 768, 768
      %32 = vsyncadd [#allocation5], %s31
      %s34 = sshll.u32 [#allocation4], 4
      %s35 = int_to_ptr.vmem [resolvable:$true] %s34
      %37 = dma.hbm_to_vmem [thread:$0]  %s1, 768, %s35, [#allocation5]
    $region9: #{audio_analysis_forward.1} parent=1 // pred_fallthru
      _
    // Predicated region
    $region10: #{audio_analysis_forward.1} parent=1 // pred_check
      _
    $region11: #{audio_analysis_forward.1} parent=1 // pred_check_branch
      %39 = sbr.rel (0) target = $region13
    $region12: #{audio_analysis_forward.1} parent=1 // pred_region
      %s41 = ssub.s32 1280, 1280
      %42 = vsyncadd [#allocation5], %s41
      %s43 = sshll.u32 [#allocation6], 4
      %s44 = int_to_ptr.vmem [resolvable:$true] %s43
      %49 = dma.hbm_to_vmem [thread:$0]  %s2, 1280, %s44, [#allocation5], 256, 256, 16
    $region13: #{audio_analysis_forward.1} parent=1 // pred_fallthru
      _
    // Predicated region
    $region14: #{audio_analysis_forward.1} parent=1 // pred_check
      _
    $region15: #{audio_analysis_forward.1} parent=1 // pred_check_branch
      %51 = sbr.rel (0) target = $region17
    $region16: #{audio_analysis_forward.1} parent=1 // pred_region
      %s53 = ssub.s32 24576, 24576
      %54 = vsyncadd [#allocation8], %s53
      %s55 = sshll.u32 [#allocation7], 4
      %s56 = int_to_ptr.vmem [resolvable:$true] %s55
      %61 = dma.hbm_to_vmem [thread:$0]  %s3, 24576, %s56, [#allocation8], 256, 256, 16
    $region17: #{audio_analysis_forward.1} parent=1 // pred_fallthru
      _
    // Predicated region
    $region18: #{audio_analysis_forward.1} parent=1 // pred_check
      _
    $region19: #{audio_analysis_forward.1} parent=1 // pred_check_branch
      %63 = sbr.rel (0) target = $region21
    $region20: #{audio_analysis_forward.1} parent=1 // pred_region
      _
    $region21: #{audio_analysis_forward.1} parent=1 // pred_fallthru
      _
    // Predicated region
    $region22: #{audio_analysis_forward.1} parent=1 // pred_check
      _
    $region23: #{audio_analysis_forward.1} parent=1 // pred_check_branch
      %65 = sbr.rel (0) target = $region25
    $region24: #{audio_analysis_forward.1} parent=1 // pred_region
      %s67 = ssub.s32 4096, 4096
      %68 = vsyncadd [#allocation8], %s67
      %s69 = sshll.u32 [#allocation9], 4
      %s70 = int_to_ptr.vmem [resolvable:$true] %s69
      %75 = dma.hbm_to_vmem [thread:$0]  %s5, 4096, %s70, [#allocation8], 128, 128, 8
    $region25: #{audio_analysis_forward.1} parent=1 // pred_fallthru
      _
    // Predicated region
    $region26: #{audio_analysis_forward.1} parent=1 // pred_check
      _
    $region27: #{audio_analysis_forward.1} parent=1 // pred_check_branch
      %77 = sbr.rel (0) target = $region29
    $region28: #{audio_analysis_forward.1} parent=1 // pred_region
      _
    $region29: #{audio_analysis_forward.1} parent=1 // pred_fallthru
      _
    // Predicated region
    $region30: #{audio_analysis_forward.1} parent=1 // pred_check
      _
    $region31: #{audio_analysis_forward.1} parent=1 // pred_check_branch
      %79 = sbr.rel (0) target = $region33
    $region32: #{audio_analysis_forward.1} parent=1 // pred_region
      %s81 = ssub.s32 2048, 2048
      %82 = vsyncadd [#allocation11], %s81
      %s83 = sshll.u32 [#allocation10], 4
      %s84 = int_to_ptr.vmem [resolvable:$true] %s83
      %89 = dma.hbm_to_vmem [thread:$0]  %s7, 2048, %s84, [#allocation11], 128, 128, 8
    $region33: #{audio_analysis_forward.1} parent=1 // pred_fallthru
      _
    // Predicated region
    $region34: #{audio_analysis_forward.1} parent=1 // pred_check
      _
    $region35: #{audio_analysis_forward.1} parent=1 // pred_check_branch
      %91 = sbr.rel (0) target = $region37
    $region36: #{audio_analysis_forward.1} parent=1 // pred_region
      _
    $region37: #{audio_analysis_forward.1} parent=1 // pred_fallthru
      _
    // Predicated region
    $region38: #{audio_analysis_forward.1} parent=1 // pred_check
      _
    $region39: #{audio_analysis_forward.1} parent=1 // pred_check_branch
      %93 = sbr.rel (0) target = $region41
    $region40: #{audio_analysis_forward.1} parent=1 // pred_region
      %94 = dma.done [#allocation3], 128
    $region41: #{audio_analysis_forward.1} parent=1 // pred_fallthru
      _
    // Predicated region
    $region42: #{audio_analysis_forward.1} parent=1 // pred_check
      _
    $region43: #{audio_analysis_forward.1} parent=1 // pred_check_branch
      %96 = sbr.rel (0) target = $region45
    $region44: #{audio_analysis_forward.1} parent=1 // pred_region
      %97 = dma.done [#allocation5], 768
    $region45: #{audio_analysis_forward.1} parent=1 // pred_fallthru
      _
    // Predicated region
    $region46: #{audio_analysis_forward.1} parent=1 // pred_check
      _
    $region47: #{audio_analysis_forward.1} parent=1 // pred_check_branch
      %99 = sbr.rel (0) target = $region49
    $region48: #{audio_analysis_forward.1} parent=1 // pred_region
      %100 = dma.done [#allocation5], 1280
    $region49: #{audio_analysis_forward.1} parent=1 // pred_fallthru
      _
    // Predicated region
    $region50: #{audio_analysis_forward.1} parent=1 // pred_check
      _
    $region51: #{audio_analysis_forward.1} parent=1 // pred_check_branch
      %102 = sbr.rel (0) target = $region53
    $region52: #{audio_analysis_forward.1} parent=1 // pred_region
      %103 = dma.done [#allocation8], 24576
    $region53: #{audio_analysis_forward.1} parent=1 // pred_fallthru
      _
    // Predicated region
    $region54: #{audio_analysis_forward.1} parent=1 // pred_check
      _
    $region55: #{audio_analysis_forward.1} parent=1 // pred_check_branch
      %105 = sbr.rel (0) target = $region57
    $region56: #{audio_analysis_forward.1} parent=1 // pred_region
      %106 = dma.done [#allocation8], 4096
    $region57: #{audio_analysis_forward.1} parent=1 // pred_fallthru
      _
    // Predicated region
    $region58: #{audio_analysis_forward.1} parent=1 // pred_check
      _
    $region59: #{audio_analysis_forward.1} parent=1 // pred_check_branch
      %108 = sbr.rel (0) target = $region61
    $region60: #{audio_analysis_forward.1} parent=1 // pred_region
      %109 = dma.done [#allocation11], 2048
    $region61: #{audio_analysis_forward.1} parent=1 // pred_fallthru
      _
    %v110 = vld [vmem:[#allocation2] sm:$0xff]
    %v111 = vld [vmem:[#allocation6] sm:$0xff]
    %v112 = vld [vmem:[#allocation6 + $0x8] sm:$0xff]
    %v113 = vld [vmem:[#allocation6 + $0x10] sm:$0xff]
    %v114 = vld [vmem:[#allocation6 + $0x18] sm:$0xff]
    %v115 = vld [vmem:[#allocation6 + $0x20] sm:$0xff]
    %v116 = vld [vmem:[#allocation6 + $0x28] sm:$0xff]
    %v117 = vld [vmem:[#allocation6 + $0x30] sm:$0xff]
    %v118 = vld [vmem:[#allocation6 + $0x38] sm:$0xff]
    %v119 = vld [vmem:[#allocation6 + $0x40] sm:$0xff]
    %v120 = vld [vmem:[#allocation6 + $0x48] sm:$0xff]
    %v121 = vld [vmem:[#allocation4] sm:$0xff]
    %v122 = vld [vmem:[#allocation4 + $0x8] sm:$0xff]
    %v123 = vld [vmem:[#allocation4 + $0x10] sm:$0xff]
    %v124 = vld [vmem:[#allocation4 + $0x18] sm:$0xff]
    %v125 = vld [vmem:[#allocation4 + $0x20] sm:$0xff]
    %v126 = vld [vmem:[#allocation4 + $0x28] sm:$0xff]
    %v127 = vld [vmem:[#allocation7] sm:$0xff]
    %v128 = vld [vmem:[#allocation7 + $0x8] sm:$0xff]
    %v129 = vld [vmem:[#allocation7 + $0x10] sm:$0xff]
    %v130 = vld [vmem:[#allocation7 + $0x18] sm:$0xff]
    %v131 = vld [vmem:[#allocation7 + $0x20] sm:$0xff]
    %v132 = vld [vmem:[#allocation7 + $0x28] sm:$0xff]
    %v133 = vld [vmem:[#allocation7 + $0x30] sm:$0xff]
    %v134 = vld [vmem:[#allocation7 + $0x38] sm:$0xff]
    %v135 = vld [vmem:[#allocation7 + $0x40] sm:$0xff]
    %v136 = vld [vmem:[#allocation7 + $0x48] sm:$0xff]
    %v137 = vld [vmem:[#allocation7 + $0x50] sm:$0xff]
    %v138 = vld [vmem:[#allocation7 + $0x58] sm:$0xff]
    %v139 = vld [vmem:[#allocation7 + $0x60] sm:$0xff]
    %v140 = vld [vmem:[#allocation7 + $0x68] sm:$0xff]
    %v141 = vld [vmem:[#allocation7 + $0x70] sm:$0xff]
    %v142 = vld [vmem:[#allocation7 + $0x78] sm:$0xff]
    %v143 = vld [vmem:[#allocation7 + $0x80] sm:$0xff]
    %v144 = vld [vmem:[#allocation7 + $0x88] sm:$0xff]
    %v145 = vld [vmem:[#allocation7 + $0x90] sm:$0xff]
    %v146 = vld [vmem:[#allocation7 + $0x98] sm:$0xff]
    %v147 = vld [vmem:[#allocation7 + $0xa0] sm:$0xff]
    %v148 = vld [vmem:[#allocation7 + $0xa8] sm:$0xff]
    %v149 = vld [vmem:[#allocation7 + $0xb0] sm:$0xff]
    %v150 = vld [vmem:[#allocation7 + $0xb8] sm:$0xff]
    %v151 = vld [vmem:[#allocation7 + $0xc0] sm:$0xff]
    %v152 = vld [vmem:[#allocation7 + $0xc8] sm:$0xff]
    %v153 = vld [vmem:[#allocation7 + $0xd0] sm:$0xff]
    %v154 = vld [vmem:[#allocation7 + $0xd8] sm:$0xff]
    %v155 = vld [vmem:[#allocation7 + $0xe0] sm:$0xff]
    %v156 = vld [vmem:[#allocation7 + $0xe8] sm:$0xff]
    %v157 = vld [vmem:[#allocation7 + $0xf0] sm:$0xff]
    %v158 = vld [vmem:[#allocation7 + $0xf8] sm:$0xff]
    %v159 = vld [vmem:[#allocation7 + $0x100] sm:$0xff]
    %v160 = vld [vmem:[#allocation7 + $0x108] sm:$0xff]
    %v161 = vld [vmem:[#allocation7 + $0x110] sm:$0xff]
    %v162 = vld [vmem:[#allocation7 + $0x118] sm:$0xff]
    %v163 = vld [vmem:[#allocation7 + $0x120] sm:$0xff]
    %v164 = vld [vmem:[#allocation7 + $0x128] sm:$0xff]
    %v165 = vld [vmem:[#allocation7 + $0x130] sm:$0xff]
    %v166 = vld [vmem:[#allocation7 + $0x138] sm:$0xff]
    %v167 = vld [vmem:[#allocation7 + $0x140] sm:$0xff]
    %v168 = vld [vmem:[#allocation7 + $0x148] sm:$0xff]
    %v169 = vld [vmem:[#allocation7 + $0x150] sm:$0xff]
    %v170 = vld [vmem:[#allocation7 + $0x158] sm:$0xff]
    %v171 = vld [vmem:[#allocation7 + $0x160] sm:$0xff]
    %v172 = vld [vmem:[#allocation7 + $0x168] sm:$0xff]
    %v173 = vld [vmem:[#allocation7 + $0x170] sm:$0xff]
    %v174 = vld [vmem:[#allocation7 + $0x178] sm:$0xff]
    %v175 = vld [vmem:[#allocation7 + $0x180] sm:$0xff]
    %v176 = vld [vmem:[#allocation7 + $0x188] sm:$0xff]
    %v177 = vld [vmem:[#allocation7 + $0x190] sm:$0xff]
    %v178 = vld [vmem:[#allocation7 + $0x198] sm:$0xff]
    %v179 = vld [vmem:[#allocation7 + $0x1a0] sm:$0xff]
    %v180 = vld [vmem:[#allocation7 + $0x1a8] sm:$0xff]
    %v181 = vld [vmem:[#allocation7 + $0x1b0] sm:$0xff]
    %v182 = vld [vmem:[#allocation7 + $0x1b8] sm:$0xff]
    %v183 = vld [vmem:[#allocation7 + $0x1c0] sm:$0xff]
    %v184 = vld [vmem:[#allocation7 + $0x1c8] sm:$0xff]
    %v185 = vld [vmem:[#allocation7 + $0x1d0] sm:$0xff]
    %v186 = vld [vmem:[#allocation7 + $0x1d8] sm:$0xff]
    %v187 = vld [vmem:[#allocation7 + $0x1e0] sm:$0xff]
    %v188 = vld [vmem:[#allocation7 + $0x1e8] sm:$0xff]
    %v189 = vld [vmem:[#allocation7 + $0x1f0] sm:$0xff]
    %v190 = vld [vmem:[#allocation7 + $0x1f8] sm:$0xff]
    %v191 = vld [vmem:[#allocation7 + $0x200] sm:$0xff]
    %v192 = vld [vmem:[#allocation7 + $0x208] sm:$0xff]
    %v193 = vld [vmem:[#allocation7 + $0x210] sm:$0xff]
    %v194 = vld [vmem:[#allocation7 + $0x218] sm:$0xff]
    %v195 = vld [vmem:[#allocation7 + $0x220] sm:$0xff]
    %v196 = vld [vmem:[#allocation7 + $0x228] sm:$0xff]
    %v197 = vld [vmem:[#allocation7 + $0x230] sm:$0xff]
    %v198 = vld [vmem:[#allocation7 + $0x238] sm:$0xff]
    %v199 = vld [vmem:[#allocation7 + $0x240] sm:$0xff]
    %v200 = vld [vmem:[#allocation7 + $0x248] sm:$0xff]
    %v201 = vld [vmem:[#allocation7 + $0x250] sm:$0xff]
    %v202 = vld [vmem:[#allocation7 + $0x258] sm:$0xff]
    %v203 = vld [vmem:[#allocation7 + $0x260] sm:$0xff]
    %v204 = vld [vmem:[#allocation7 + $0x268] sm:$0xff]
    %v205 = vld [vmem:[#allocation7 + $0x270] sm:$0xff]
    %v206 = vld [vmem:[#allocation7 + $0x278] sm:$0xff]
    %v207 = vld [vmem:[#allocation7 + $0x280] sm:$0xff]
    %v208 = vld [vmem:[#allocation7 + $0x288] sm:$0xff]
    %v209 = vld [vmem:[#allocation7 + $0x290] sm:$0xff]
    %v210 = vld [vmem:[#allocation7 + $0x298] sm:$0xff]
    %v211 = vld [vmem:[#allocation7 + $0x2a0] sm:$0xff]
    %v212 = vld [vmem:[#allocation7 + $0x2a8] sm:$0xff]
    %v213 = vld [vmem:[#allocation7 + $0x2b0] sm:$0xff]
    %v214 = vld [vmem:[#allocation7 + $0x2b8] sm:$0xff]
    %v215 = vld [vmem:[#allocation7 + $0x2c0] sm:$0xff]
    %v216 = vld [vmem:[#allocation7 + $0x2c8] sm:$0xff]
    %v217 = vld [vmem:[#allocation7 + $0x2d0] sm:$0xff]
    %v218 = vld [vmem:[#allocation7 + $0x2d8] sm:$0xff]
    %v219 = vld [vmem:[#allocation7 + $0x2e0] sm:$0xff]
    %v220 = vld [vmem:[#allocation7 + $0x2e8] sm:$0xff]
    %v221 = vld [vmem:[#allocation7 + $0x2f0] sm:$0xff]
    %v222 = vld [vmem:[#allocation7 + $0x2f8] sm:$0xff]
    %v223 = vld [vmem:[#allocation7 + $0x300] sm:$0xff]
    %v224 = vld [vmem:[#allocation7 + $0x308] sm:$0xff]
    %v225 = vld [vmem:[#allocation7 + $0x310] sm:$0xff]
    %v226 = vld [vmem:[#allocation7 + $0x318] sm:$0xff]
    %v227 = vld [vmem:[#allocation7 + $0x320] sm:$0xff]
    %v228 = vld [vmem:[#allocation7 + $0x328] sm:$0xff]
    %v229 = vld [vmem:[#allocation7 + $0x330] sm:$0xff]
    %v230 = vld [vmem:[#allocation7 + $0x338] sm:$0xff]
    %v231 = vld [vmem:[#allocation7 + $0x340] sm:$0xff]
    %v232 = vld [vmem:[#allocation7 + $0x348] sm:$0xff]
    %v233 = vld [vmem:[#allocation7 + $0x350] sm:$0xff]
    %v234 = vld [vmem:[#allocation7 + $0x358] sm:$0xff]
    %v235 = vld [vmem:[#allocation7 + $0x360] sm:$0xff]
    %v236 = vld [vmem:[#allocation7 + $0x368] sm:$0xff]
    %v237 = vld [vmem:[#allocation7 + $0x370] sm:$0xff]
    %v238 = vld [vmem:[#allocation7 + $0x378] sm:$0xff]
    %v239 = vld [vmem:[#allocation7 + $0x380] sm:$0xff]
    %v240 = vld [vmem:[#allocation7 + $0x388] sm:$0xff]
    %v241 = vld [vmem:[#allocation7 + $0x390] sm:$0xff]
    %v242 = vld [vmem:[#allocation7 + $0x398] sm:$0xff]
    %v243 = vld [vmem:[#allocation7 + $0x3a0] sm:$0xff]
    %v244 = vld [vmem:[#allocation7 + $0x3a8] sm:$0xff]
    %v245 = vld [vmem:[#allocation7 + $0x3b0] sm:$0xff]
    %v246 = vld [vmem:[#allocation7 + $0x3b8] sm:$0xff]
    %v247 = vld [vmem:[#allocation7 + $0x3c0] sm:$0xff]
    %v248 = vld [vmem:[#allocation7 + $0x3c8] sm:$0xff]
    %v249 = vld [vmem:[#allocation7 + $0x3d0] sm:$0xff]
    %v250 = vld [vmem:[#allocation7 + $0x3d8] sm:$0xff]
    %v251 = vld [vmem:[#allocation7 + $0x3e0] sm:$0xff]
    %v252 = vld [vmem:[#allocation7 + $0x3e8] sm:$0xff]
    %v253 = vld [vmem:[#allocation7 + $0x3f0] sm:$0xff]
    %v254 = vld [vmem:[#allocation7 + $0x3f8] sm:$0xff]
    %v255 = vld [vmem:[#allocation7 + $0x400] sm:$0xff]
    %v256 = vld [vmem:[#allocation7 + $0x408] sm:$0xff]
    %v257 = vld [vmem:[#allocation7 + $0x410] sm:$0xff]
    %v258 = vld [vmem:[#allocation7 + $0x418] sm:$0xff]
    %v259 = vld [vmem:[#allocation7 + $0x420] sm:$0xff]
    %v260 = vld [vmem:[#allocation7 + $0x428] sm:$0xff]
    %v261 = vld [vmem:[#allocation7 + $0x430] sm:$0xff]
    %v262 = vld [vmem:[#allocation7 + $0x438] sm:$0xff]
    %v263 = vld [vmem:[#allocation7 + $0x440] sm:$0xff]
    %v264 = vld [vmem:[#allocation7 + $0x448] sm:$0xff]
    %v265 = vld [vmem:[#allocation7 + $0x450] sm:$0xff]
    %v266 = vld [vmem:[#allocation7 + $0x458] sm:$0xff]
    %v267 = vld [vmem:[#allocation7 + $0x460] sm:$0xff]
    %v268 = vld [vmem:[#allocation7 + $0x468] sm:$0xff]
    %v269 = vld [vmem:[#allocation7 + $0x470] sm:$0xff]
    %v270 = vld [vmem:[#allocation7 + $0x478] sm:$0xff]
    %v271 = vld [vmem:[#allocation7 + $0x480] sm:$0xff]
    %v272 = vld [vmem:[#allocation7 + $0x488] sm:$0xff]
    %v273 = vld [vmem:[#allocation7 + $0x490] sm:$0xff]
    %v274 = vld [vmem:[#allocation7 + $0x498] sm:$0xff]
    %v275 = vld [vmem:[#allocation7 + $0x4a0] sm:$0xff]
    %v276 = vld [vmem:[#allocation7 + $0x4a8] sm:$0xff]
    %v277 = vld [vmem:[#allocation7 + $0x4b0] sm:$0xff]
    %v278 = vld [vmem:[#allocation7 + $0x4b8] sm:$0xff]
    %v279 = vld [vmem:[#allocation7 + $0x4c0] sm:$0xff]
    %v280 = vld [vmem:[#allocation7 + $0x4c8] sm:$0xff]
    %v281 = vld [vmem:[#allocation7 + $0x4d0] sm:$0xff]
    %v282 = vld [vmem:[#allocation7 + $0x4d8] sm:$0xff]
    %v283 = vld [vmem:[#allocation7 + $0x4e0] sm:$0xff]
    %v284 = vld [vmem:[#allocation7 + $0x4e8] sm:$0xff]
    %v285 = vld [vmem:[#allocation7 + $0x4f0] sm:$0xff]
    %v286 = vld [vmem:[#allocation7 + $0x4f8] sm:$0xff]
    %v287 = vld [vmem:[#allocation7 + $0x500] sm:$0xff]
    %v288 = vld [vmem:[#allocation7 + $0x508] sm:$0xff]
    %v289 = vld [vmem:[#allocation7 + $0x510] sm:$0xff]
    %v290 = vld [vmem:[#allocation7 + $0x518] sm:$0xff]
    %v291 = vld [vmem:[#allocation7 + $0x520] sm:$0xff]
    %v292 = vld [vmem:[#allocation7 + $0x528] sm:$0xff]
    %v293 = vld [vmem:[#allocation7 + $0x530] sm:$0xff]
    %v294 = vld [vmem:[#allocation7 + $0x538] sm:$0xff]
    %v295 = vld [vmem:[#allocation7 + $0x540] sm:$0xff]
    %v296 = vld [vmem:[#allocation7 + $0x548] sm:$0xff]
    %v297 = vld [vmem:[#allocation7 + $0x550] sm:$0xff]
    %v298 = vld [vmem:[#allocation7 + $0x558] sm:$0xff]
    %v299 = vld [vmem:[#allocation7 + $0x560] sm:$0xff]
    %v300 = vld [vmem:[#allocation7 + $0x568] sm:$0xff]
    %v301 = vld [vmem:[#allocation7 + $0x570] sm:$0xff]
    %v302 = vld [vmem:[#allocation7 + $0x578] sm:$0xff]
    %v303 = vld [vmem:[#allocation7 + $0x580] sm:$0xff]
    %v304 = vld [vmem:[#allocation7 + $0x588] sm:$0xff]
    %v305 = vld [vmem:[#allocation7 + $0x590] sm:$0xff]
    %v306 = vld [vmem:[#allocation7 + $0x598] sm:$0xff]
    %v307 = vld [vmem:[#allocation7 + $0x5a0] sm:$0xff]
    %v308 = vld [vmem:[#allocation7 + $0x5a8] sm:$0xff]
    %v309 = vld [vmem:[#allocation7 + $0x5b0] sm:$0xff]
    %v310 = vld [vmem:[#allocation7 + $0x5b8] sm:$0xff]
    %v311 = vld [vmem:[#allocation7 + $0x5c0] sm:$0xff]
    %v312 = vld [vmem:[#allocation7 + $0x5c8] sm:$0xff]
    %v313 = vld [vmem:[#allocation7 + $0x5d0] sm:$0xff]
    %v314 = vld [vmem:[#allocation7 + $0x5d8] sm:$0xff]
    %v315 = vld [vmem:[#allocation7 + $0x5e0] sm:$0xff]
    %v316 = vld [vmem:[#allocation7 + $0x5e8] sm:$0xff]
    %v317 = vld [vmem:[#allocation7 + $0x5f0] sm:$0xff]
    %v318 = vld [vmem:[#allocation7 + $0x5f8] sm:$0xff]
    %319 = vmatprep.subr.mxu0 %v128
    %320 = vmatpush1.msra.mxu0 %v127
    %321 = vmatprep.subr.mxu0 %v130
    %322 = vmatpush1.msra.mxu0 %v129
    %323 = vmatprep.subr.mxu0 %v132
    %324 = vmatpush1.msra.mxu0 %v131
    %325 = vmatprep.subr.mxu0 %v134
    %326 = vmatpush1.msra.mxu0 %v133
    %327 = vmatprep.subr.mxu0 %v136
    %328 = vmatpush1.msra.mxu0 %v135
    %329 = vmatprep.subr.mxu0 %v138
    %330 = vmatpush1.msra.mxu0 %v137
    %331 = vmatprep.subr.mxu0 %v140
    %332 = vmatpush1.msra.mxu0 %v139
    %333 = vmatprep.subr.mxu0 %v142
    %334 = vmatpush1.msra.mxu0 %v141
    %335 = vmatprep.subr.mxu0 %v144
    %336 = vmatpush1.msra.mxu0 %v143
    %337 = vmatprep.subr.mxu0 %v146
    %338 = vmatpush1.msra.mxu0 %v145
    %339 = vmatprep.subr.mxu0 %v148
    %340 = vmatpush1.msra.mxu0 %v147
    %341 = vmatprep.subr.mxu0 %v150
    %342 = vmatpush1.msra.mxu0 %v149
    %343 = vmatprep.subr.mxu0 %v152
    %344 = vmatpush1.msra.mxu0 %v151
    %345 = vmatprep.subr.mxu0 %v154
    %346 = vmatpush1.msra.mxu0 %v153
    %347 = vmatprep.subr.mxu0 %v156
    %348 = vmatpush1.msra.mxu0 %v155
    %349 = vmatprep.subr.mxu0 %v158
    %350 = vmatpush1.msra.mxu0 %v157
    %351 = vmatprep.subr.mxu0 %v160
    %352 = vmatpush1.msra.mxu0 %v159
    %353 = vmatprep.subr.mxu0 %v162
    %354 = vmatpush1.msra.mxu0 %v161
    %355 = vmatprep.subr.mxu0 %v164
    %356 = vmatpush1.msra.mxu0 %v163
    %357 = vmatprep.subr.mxu0 %v166
    %358 = vmatpush1.msra.mxu0 %v165
    %359 = vmatprep.subr.mxu0 %v168
    %360 = vmatpush1.msra.mxu0 %v167
    %361 = vmatprep.subr.mxu0 %v170
    %362 = vmatpush1.msra.mxu0 %v169
    %363 = vmatprep.subr.mxu0 %v172
    %364 = vmatpush1.msra.mxu0 %v171
    %365 = vmatprep.subr.mxu0 %v174
    %366 = vmatpush1.msra.mxu0 %v173
    %367 = vmatprep.subr.mxu0 %v176
    %368 = vmatpush1.msra.mxu0 %v175
    %369 = vmatprep.subr.mxu0 %v178
    %370 = vmatpush1.msra.mxu0 %v177
    %371 = vmatprep.subr.mxu0 %v180
    %372 = vmatpush1.msra.mxu0 %v179
    %373 = vmatprep.subr.mxu0 %v182
    %374 = vmatpush1.msra.mxu0 %v181
    %375 = vmatprep.subr.mxu0 %v184
    %376 = vmatpush1.msra.mxu0 %v183
    %377 = vmatprep.subr.mxu0 %v186
    %378 = vmatpush1.msra.mxu0 %v185
    %379 = vmatprep.subr.mxu0 %v188
    %380 = vmatpush1.msra.mxu0 %v187
    %381 = vmatprep.subr.mxu0 %v190
    %382 = vmatpush1.msra.mxu0 %v189
    %383 = vmatprep.mubr.f32.mxu0 %v122
    %384 = vmatmul.mubr.f32.gmra.mrb[0].mxu0 %v121
    %v385 = vpop.f32.mrb[0].mxu0
    %v386 = vadd.f32 0.0, %v385
    %v387 = vpop.f32.mrb[0].mxu0
    %v388 = vadd.f32 0.0, %v387
    %389 = vdwg.mxu0
    %390 = vmatprep.subr.mxu0 %v192
    %391 = vmatpush1.msra.mxu0 %v191
    %392 = vmatprep.subr.mxu0 %v194
    %393 = vmatpush1.msra.mxu0 %v193
    %394 = vmatprep.subr.mxu0 %v196
    %395 = vmatpush1.msra.mxu0 %v195
    %396 = vmatprep.subr.mxu0 %v198
    %397 = vmatpush1.msra.mxu0 %v197
    %398 = vmatprep.subr.mxu0 %v200
    %399 = vmatpush1.msra.mxu0 %v199
    %400 = vmatprep.subr.mxu0 %v202
    %401 = vmatpush1.msra.mxu0 %v201
    %402 = vmatprep.subr.mxu0 %v204
    %403 = vmatpush1.msra.mxu0 %v203
    %404 = vmatprep.subr.mxu0 %v206
    %405 = vmatpush1.msra.mxu0 %v205
    %406 = vmatprep.subr.mxu0 %v208
    %407 = vmatpush1.msra.mxu0 %v207
    %408 = vmatprep.subr.mxu0 %v210
    %409 = vmatpush1.msra.mxu0 %v209
    %410 = vmatprep.subr.mxu0 %v212
    %411 = vmatpush1.msra.mxu0 %v211
    %412 = vmatprep.subr.mxu0 %v214
    %413 = vmatpush1.msra.mxu0 %v213
    %414 = vmatprep.subr.mxu0 %v216
    %415 = vmatpush1.msra.mxu0 %v215
    %416 = vmatprep.subr.mxu0 %v218
    %417 = vmatpush1.msra.mxu0 %v217
    %418 = vmatprep.subr.mxu0 %v220
    %419 = vmatpush1.msra.mxu0 %v219
    %420 = vmatprep.subr.mxu0 %v222
    %421 = vmatpush1.msra.mxu0 %v221
    %422 = vmatprep.subr.mxu0 %v224
    %423 = vmatpush1.msra.mxu0 %v223
    %424 = vmatprep.subr.mxu0 %v226
    %425 = vmatpush1.msra.mxu0 %v225
    %426 = vmatprep.subr.mxu0 %v228
    %427 = vmatpush1.msra.mxu0 %v227
    %428 = vmatprep.subr.mxu0 %v230
    %429 = vmatpush1.msra.mxu0 %v229
    %430 = vmatprep.subr.mxu0 %v232
    %431 = vmatpush1.msra.mxu0 %v231
    %432 = vmatprep.subr.mxu0 %v234
    %433 = vmatpush1.msra.mxu0 %v233
    %434 = vmatprep.subr.mxu0 %v236
    %435 = vmatpush1.msra.mxu0 %v235
    %436 = vmatprep.subr.mxu0 %v238
    %437 = vmatpush1.msra.mxu0 %v237
    %438 = vmatprep.subr.mxu0 %v240
    %439 = vmatpush1.msra.mxu0 %v239
    %440 = vmatprep.subr.mxu0 %v242
    %441 = vmatpush1.msra.mxu0 %v241
    %442 = vmatprep.subr.mxu0 %v244
    %443 = vmatpush1.msra.mxu0 %v243
    %444 = vmatprep.subr.mxu0 %v246
    %445 = vmatpush1.msra.mxu0 %v245
    %446 = vmatprep.subr.mxu0 %v248
    %447 = vmatpush1.msra.mxu0 %v247
    %448 = vmatprep.subr.mxu0 %v250
    %449 = vmatpush1.msra.mxu0 %v249
    %450 = vmatprep.subr.mxu0 %v252
    %451 = vmatpush1.msra.mxu0 %v251
    %452 = vmatprep.subr.mxu0 %v254
    %453 = vmatpush1.msra.mxu0 %v253
    %454 = vmatprep.mubr.f32.mxu0 %v124
    %455 = vmatmul.mubr.f32.gmra.mrb[0].mxu0 %v123
    %v456 = vpop.f32.mrb[0].mxu0
    %v457 = vadd.f32 %v386, %v456
    %v458 = vpop.f32.mrb[0].mxu0
    %v459 = vadd.f32 %v388, %v458
    %460 = vdwg.mxu0
    %461 = vmatprep.subr.mxu0 %v256
    %462 = vmatpush1.msra.mxu0 %v255
    %463 = vmatprep.subr.mxu0 %v258
    %464 = vmatpush1.msra.mxu0 %v257
    %465 = vmatprep.subr.mxu0 %v260
    %466 = vmatpush1.msra.mxu0 %v259
    %467 = vmatprep.subr.mxu0 %v262
    %468 = vmatpush1.msra.mxu0 %v261
    %469 = vmatprep.subr.mxu0 %v264
    %470 = vmatpush1.msra.mxu0 %v263
    %471 = vmatprep.subr.mxu0 %v266
    %472 = vmatpush1.msra.mxu0 %v265
    %473 = vmatprep.subr.mxu0 %v268
    %474 = vmatpush1.msra.mxu0 %v267
    %475 = vmatprep.subr.mxu0 %v270
    %476 = vmatpush1.msra.mxu0 %v269
    %477 = vmatprep.subr.mxu0 %v272
    %478 = vmatpush1.msra.mxu0 %v271
    %479 = vmatprep.subr.mxu0 %v274
    %480 = vmatpush1.msra.mxu0 %v273
    %481 = vmatprep.subr.mxu0 %v276
    %482 = vmatpush1.msra.mxu0 %v275
    %483 = vmatprep.subr.mxu0 %v278
    %484 = vmatpush1.msra.mxu0 %v277
    %485 = vmatprep.subr.mxu0 %v280
    %486 = vmatpush1.msra.mxu0 %v279
    %487 = vmatprep.subr.mxu0 %v282
    %488 = vmatpush1.msra.mxu0 %v281
    %489 = vmatprep.subr.mxu0 %v284
    %490 = vmatpush1.msra.mxu0 %v283
    %491 = vmatprep.subr.mxu0 %v286
    %492 = vmatpush1.msra.mxu0 %v285
    %493 = vmatprep.subr.mxu0 %v288
    %494 = vmatpush1.msra.mxu0 %v287
    %495 = vmatprep.subr.mxu0 %v290
    %496 = vmatpush1.msra.mxu0 %v289
    %497 = vmatprep.subr.mxu0 %v292
    %498 = vmatpush1.msra.mxu0 %v291
    %499 = vmatprep.subr.mxu0 %v294
    %500 = vmatpush1.msra.mxu0 %v293
    %501 = vmatprep.subr.mxu0 %v296
    %502 = vmatpush1.msra.mxu0 %v295
    %503 = vmatprep.subr.mxu0 %v298
    %504 = vmatpush1.msra.mxu0 %v297
    %505 = vmatprep.subr.mxu0 %v300
    %506 = vmatpush1.msra.mxu0 %v299
    %507 = vmatprep.subr.mxu0 %v302
    %508 = vmatpush1.msra.mxu0 %v301
    %509 = vmatprep.subr.mxu0 %v304
    %510 = vmatpush1.msra.mxu0 %v303
    %511 = vmatprep.subr.mxu0 %v306
    %512 = vmatpush1.msra.mxu0 %v305
    %513 = vmatprep.subr.mxu0 %v308
    %514 = vmatpush1.msra.mxu0 %v307
    %515 = vmatprep.subr.mxu0 %v310
    %516 = vmatpush1.msra.mxu0 %v309
    %517 = vmatprep.subr.mxu0 %v312
    %518 = vmatpush1.msra.mxu0 %v311
    %519 = vmatprep.subr.mxu0 %v314
    %520 = vmatpush1.msra.mxu0 %v313
    %521 = vmatprep.subr.mxu0 %v316
    %522 = vmatpush1.msra.mxu0 %v315
    %523 = vmatprep.subr.mxu0 %v318
    %524 = vmatpush1.msra.mxu0 %v317
    %525 = vmatprep.mubr.f32.mxu0 %v126
    %526 = vmatmul.mubr.f32.gmra.mrb[0].mxu0 %v125
    %v527 = vpop.f32.mrb[0].mxu0
    %v528 = vadd.f32 %v457, %v527
    %v529 = vpop.f32.mrb[0].mxu0
    %v530 = vadd.f32 %v459, %v529
    %531 = vdwg.mxu0
    %vm532 = vcmask 326656
    %v534 = vsel %vm532, %v110, 0
    %536 = vmatprep.subr.mxu0 %v112
    %537 = vmatpush1.msra.mxu0 %v111
    %538 = vmatprep.subr.mxu0 %v114
    %539 = vmatpush1.msra.mxu0 %v113
    %540 = vmatprep.subr.mxu0 %v116
    %541 = vmatpush1.msra.mxu0 %v115
    %542 = vmatprep.subr.mxu0 %v118
    %543 = vmatpush1.msra.mxu0 %v117
    %544 = vmatprep.subr.mxu0 %v120
    %545 = vmatpush1.msra.mxu0 %v119
    %546 = vmatprep.subr.mxu0 0.0
    %547 = vmatpush1.msra.mxu0 0.0
    %548 = vmatprep.subr.mxu0 0.0
    %549 = vmatpush1.msra.mxu0 0.0
    %550 = vmatprep.subr.mxu0 0.0
    %551 = vmatpush1.msra.mxu0 0.0
    %552 = vmatprep.subr.mxu0 0.0
    %553 = vmatpush1.msra.mxu0 0.0
    %554 = vmatprep.subr.mxu0 0.0
    %555 = vmatpush1.msra.mxu0 0.0
    %556 = vmatprep.subr.mxu0 0.0
    %557 = vmatpush1.msra.mxu0 0.0
    %558 = vmatprep.subr.mxu0 0.0
    %559 = vmatpush1.msra.mxu0 0.0
    %560 = vmatprep.subr.mxu0 0.0
    %561 = vmatpush1.msra.mxu0 0.0
    %562 = vmatprep.subr.mxu0 0.0
    %563 = vmatpush1.msra.mxu0 0.0
    %564 = vmatprep.subr.mxu0 0.0
    %565 = vmatpush1.msra.mxu0 0.0
    %566 = vmatprep.subr.mxu0 0.0
    %567 = vmatpush1.msra.mxu0 0.0
    %568 = vmatprep.subr.mxu0 0.0
    %569 = vmatpush1.msra.mxu0 0.0
    %570 = vmatprep.subr.mxu0 0.0
    %571 = vmatpush1.msra.mxu0 0.0
    %572 = vmatprep.subr.mxu0 0.0
    %573 = vmatpush1.msra.mxu0 0.0
    %574 = vmatprep.subr.mxu0 0.0
    %575 = vmatpush1.msra.mxu0 0.0
    %576 = vmatprep.subr.mxu0 0.0
    %577 = vmatpush1.msra.mxu0 0.0
    %578 = vmatprep.subr.mxu0 0.0
    %579 = vmatpush1.msra.mxu0 0.0
    %580 = vmatprep.subr.mxu0 0.0
    %581 = vmatpush1.msra.mxu0 0.0
    %582 = vmatprep.subr.mxu0 0.0
    %583 = vmatpush1.msra.mxu0 0.0
    %584 = vmatprep.subr.mxu0 0.0
    %585 = vmatpush1.msra.mxu0 0.0
    %586 = vmatprep.subr.mxu0 0.0
    %587 = vmatpush1.msra.mxu0 0.0
    %588 = vmatprep.subr.mxu0 0.0
    %589 = vmatpush1.msra.mxu0 0.0
    %590 = vmatprep.subr.mxu0 0.0
    %591 = vmatpush1.msra.mxu0 0.0
    %592 = vmatprep.subr.mxu0 0.0
    %593 = vmatpush1.msra.mxu0 0.0
    %594 = vmatprep.subr.mxu0 0.0
    %595 = vmatpush1.msra.mxu0 0.0
    %596 = vmatprep.subr.mxu0 0.0
    %597 = vmatpush1.msra.mxu0 0.0
    %598 = vmatprep.subr.mxu0 0.0
    %599 = vmatpush1.msra.mxu0 0.0
    %600 = vmatprep.mubr.f32.mxu0 0.0
    %601 = vmatmul.mubr.f32.gmra.mrb[0].mxu0 %v534
    %v602 = vpop.f32.mrb[0].mxu0
    %v603 = vadd.f32 %v528, %v602
    %v604 = vpop.f32.mrb[0].mxu0
    %v605 = vadd.f32 %v530, %v604
    %606 = vdwg.mxu0
    %v607 = vld [vmem:[%s4] sm:$0x3]
    %v609 = vlaneseq
    %v610 = vshrl.u32 %v609, 7
    %v611 = vsub.s32 0, %v610
    %v612 = vrot.slane %v607, %v611
    %v613 = vlaneseq
    %v614 = vshrl.u32 %v613, 7
    %v615 = vsub.s32 1, %v614
    %v616 = vrot.slane %v607, %v615
    %v619 = vadd.f32 %v603, %v612
    %v620 = vadd.f32 %v605, %v616
    %v621 = vld [vmem:[#allocation9] sm:$0xff]
    %v622 = vld [vmem:[#allocation9 + $0x8] sm:$0xff]
    %v623 = vld [vmem:[#allocation9 + $0x10] sm:$0xff]
    %v624 = vld [vmem:[#allocation9 + $0x18] sm:$0xff]
    %v625 = vld [vmem:[#allocation9 + $0x20] sm:$0xff]
    %v626 = vld [vmem:[#allocation9 + $0x28] sm:$0xff]
    %v627 = vld [vmem:[#allocation9 + $0x30] sm:$0xff]
    %v628 = vld [vmem:[#allocation9 + $0x38] sm:$0xff]
    %v629 = vld [vmem:[#allocation9 + $0x40] sm:$0xff]
    %v630 = vld [vmem:[#allocation9 + $0x48] sm:$0xff]
    %v631 = vld [vmem:[#allocation9 + $0x50] sm:$0xff]
    %v632 = vld [vmem:[#allocation9 + $0x58] sm:$0xff]
    %v633 = vld [vmem:[#allocation9 + $0x60] sm:$0xff]
    %v634 = vld [vmem:[#allocation9 + $0x68] sm:$0xff]
    %v635 = vld [vmem:[#allocation9 + $0x70] sm:$0xff]
    %v636 = vld [vmem:[#allocation9 + $0x78] sm:$0xff]
    %v637 = vld [vmem:[#allocation9 + $0x80] sm:$0xff]
    %v638 = vld [vmem:[#allocation9 + $0x88] sm:$0xff]
    %v639 = vld [vmem:[#allocation9 + $0x90] sm:$0xff]
    %v640 = vld [vmem:[#allocation9 + $0x98] sm:$0xff]
    %v641 = vld [vmem:[#allocation9 + $0xa0] sm:$0xff]
    %v642 = vld [vmem:[#allocation9 + $0xa8] sm:$0xff]
    %v643 = vld [vmem:[#allocation9 + $0xb0] sm:$0xff]
    %v644 = vld [vmem:[#allocation9 + $0xb8] sm:$0xff]
    %v645 = vld [vmem:[#allocation9 + $0xc0] sm:$0xff]
    %v646 = vld [vmem:[#allocation9 + $0xc8] sm:$0xff]
    %v647 = vld [vmem:[#allocation9 + $0xd0] sm:$0xff]
    %v648 = vld [vmem:[#allocation9 + $0xd8] sm:$0xff]
    %v649 = vld [vmem:[#allocation9 + $0xe0] sm:$0xff]
    %v650 = vld [vmem:[#allocation9 + $0xe8] sm:$0xff]
    %v651 = vld [vmem:[#allocation9 + $0xf0] sm:$0xff]
    %v652 = vld [vmem:[#allocation9 + $0xf8] sm:$0xff]
    %v653 = vld [vmem:[%s6] sm:$0x1]
    %v655 = vlaneseq
    %v656 = vshrl.u32 %v655, 7
    %v657 = vsub.s32 0, %v656
    %v658 = vrot.slane %v653, %v657
    %660 = vmatprep.subr.mxu0 0.0
    %661 = vmatpush1.msra.mxu0 %v621
    %662 = vmatprep.subr.mxu0 0.0
    %663 = vmatpush1.msra.mxu0 %v622
    %664 = vmatprep.subr.mxu0 0.0
    %665 = vmatpush1.msra.mxu0 %v623
    %666 = vmatprep.subr.mxu0 0.0
    %667 = vmatpush1.msra.mxu0 %v624
    %668 = vmatprep.subr.mxu0 0.0
    %669 = vmatpush1.msra.mxu0 %v625
    %670 = vmatprep.subr.mxu0 0.0
    %671 = vmatpush1.msra.mxu0 %v626
    %672 = vmatprep.subr.mxu0 0.0
    %673 = vmatpush1.msra.mxu0 %v627
    %674 = vmatprep.subr.mxu0 0.0
    %675 = vmatpush1.msra.mxu0 %v628
    %676 = vmatprep.subr.mxu0 0.0
    %677 = vmatpush1.msra.mxu0 %v629
    %678 = vmatprep.subr.mxu0 0.0
    %679 = vmatpush1.msra.mxu0 %v630
    %680 = vmatprep.subr.mxu0 0.0
    %681 = vmatpush1.msra.mxu0 %v631
    %682 = vmatprep.subr.mxu0 0.0
    %683 = vmatpush1.msra.mxu0 %v632
    %684 = vmatprep.subr.mxu0 0.0
    %685 = vmatpush1.msra.mxu0 %v633
    %686 = vmatprep.subr.mxu0 0.0
    %687 = vmatpush1.msra.mxu0 %v634
    %688 = vmatprep.subr.mxu0 0.0
    %689 = vmatpush1.msra.mxu0 %v635
    %690 = vmatprep.subr.mxu0 0.0
    %691 = vmatpush1.msra.mxu0 %v636
    %692 = vmatprep.subr.mxu0 0.0
    %693 = vmatpush1.msra.mxu0 %v637
    %694 = vmatprep.subr.mxu0 0.0
    %695 = vmatpush1.msra.mxu0 %v638
    %696 = vmatprep.subr.mxu0 0.0
    %697 = vmatpush1.msra.mxu0 %v639
    %698 = vmatprep.subr.mxu0 0.0
    %699 = vmatpush1.msra.mxu0 %v640
    %700 = vmatprep.subr.mxu0 0.0
    %701 = vmatpush1.msra.mxu0 %v641
    %702 = vmatprep.subr.mxu0 0.0
    %703 = vmatpush1.msra.mxu0 %v642
    %704 = vmatprep.subr.mxu0 0.0
    %705 = vmatpush1.msra.mxu0 %v643
    %706 = vmatprep.subr.mxu0 0.0
    %707 = vmatpush1.msra.mxu0 %v644
    %708 = vmatprep.subr.mxu0 0.0
    %709 = vmatpush1.msra.mxu0 %v645
    %710 = vmatprep.subr.mxu0 0.0
    %711 = vmatpush1.msra.mxu0 %v646
    %712 = vmatprep.subr.mxu0 0.0
    %713 = vmatpush1.msra.mxu0 %v647
    %714 = vmatprep.subr.mxu0 0.0
    %715 = vmatpush1.msra.mxu0 %v648
    %716 = vmatprep.subr.mxu0 0.0
    %717 = vmatpush1.msra.mxu0 %v649
    %718 = vmatprep.subr.mxu0 0.0
    %719 = vmatpush1.msra.mxu0 %v650
    %720 = vmatprep.subr.mxu0 0.0
    %721 = vmatpush1.msra.mxu0 %v651
    %722 = vmatprep.subr.mxu0 0.0
    %723 = vmatpush1.msra.mxu0 %v652
    %724 = vmatprep.mubr.f32.mxu0 %v620
    %725 = vmatmul.mubr.f32.gmra.mrb[0].mxu0 %v619
    %v726 = vpop.f32.mrb[0].mxu0
    %v727 = vadd.f32 %v658, %v726
    %v728 = vpop.f32.mrb[0].mxu0
    %729 = vdwg.mxu0
    %v730 = vmax.f32 %v727, 0.0
    %v731 = vld [vmem:[#allocation10] sm:$0xff]
    %v732 = vld [vmem:[#allocation10 + $0x8] sm:$0xff]
    %v733 = vld [vmem:[#allocation10 + $0x10] sm:$0xff]
    %v734 = vld [vmem:[#allocation10 + $0x18] sm:$0xff]
    %v735 = vld [vmem:[#allocation10 + $0x20] sm:$0xff]
    %v736 = vld [vmem:[#allocation10 + $0x28] sm:$0xff]
    %v737 = vld [vmem:[#allocation10 + $0x30] sm:$0xff]
    %v738 = vld [vmem:[#allocation10 + $0x38] sm:$0xff]
    %v739 = vld [vmem:[#allocation10 + $0x40] sm:$0xff]
    %v740 = vld [vmem:[#allocation10 + $0x48] sm:$0xff]
    %v741 = vld [vmem:[#allocation10 + $0x50] sm:$0xff]
    %v742 = vld [vmem:[#allocation10 + $0x58] sm:$0xff]
    %v743 = vld [vmem:[#allocation10 + $0x60] sm:$0xff]
    %v744 = vld [vmem:[#allocation10 + $0x68] sm:$0xff]
    %v745 = vld [vmem:[#allocation10 + $0x70] sm:$0xff]
    %v746 = vld [vmem:[#allocation10 + $0x78] sm:$0xff]
    %v747 = vld [vmem:[%s8] sm:$0x1]
    %v749 = vlaneseq
    %v750 = vshrl.u32 %v749, 7
    %v751 = vsub.s32 0, %v750
    %v752 = vrot.slane %v747, %v751
    %754 = vmatprep.subr.mxu0 0.0
    %755 = vmatpush1.msra.mxu0 %v731
    %756 = vmatprep.subr.mxu0 0.0
    %757 = vmatpush1.msra.mxu0 %v732
    %758 = vmatprep.subr.mxu0 0.0
    %759 = vmatpush1.msra.mxu0 %v733
    %760 = vmatprep.subr.mxu0 0.0
    %761 = vmatpush1.msra.mxu0 %v734
    %762 = vmatprep.subr.mxu0 0.0
    %763 = vmatpush1.msra.mxu0 %v735
    %764 = vmatprep.subr.mxu0 0.0
    %765 = vmatpush1.msra.mxu0 %v736
    %766 = vmatprep.subr.mxu0 0.0
    %767 = vmatpush1.msra.mxu0 %v737
    %768 = vmatprep.subr.mxu0 0.0
    %769 = vmatpush1.msra.mxu0 %v738
    %770 = vmatprep.subr.mxu0 0.0
    %771 = vmatpush1.msra.mxu0 %v739
    %772 = vmatprep.subr.mxu0 0.0
    %773 = vmatpush1.msra.mxu0 %v740
    %774 = vmatprep.subr.mxu0 0.0
    %775 = vmatpush1.msra.mxu0 %v741
    %776 = vmatprep.subr.mxu0 0.0
    %777 = vmatpush1.msra.mxu0 %v742
    %778 = vmatprep.subr.mxu0 0.0
    %779 = vmatpush1.msra.mxu0 %v743
    %780 = vmatprep.subr.mxu0 0.0
    %781 = vmatpush1.msra.mxu0 %v744
    %782 = vmatprep.subr.mxu0 0.0
    %783 = vmatpush1.msra.mxu0 %v745
    %784 = vmatprep.subr.mxu0 0.0
    %785 = vmatpush1.msra.mxu0 %v746
    %786 = vmatprep.subr.mxu0 0.0
    %787 = vmatpush1.msra.mxu0 0.0
    %788 = vmatprep.subr.mxu0 0.0
    %789 = vmatpush1.msra.mxu0 0.0
    %790 = vmatprep.subr.mxu0 0.0
    %791 = vmatpush1.msra.mxu0 0.0
    %792 = vmatprep.subr.mxu0 0.0
    %793 = vmatpush1.msra.mxu0 0.0
    %794 = vmatprep.subr.mxu0 0.0
    %795 = vmatpush1.msra.mxu0 0.0
    %796 = vmatprep.subr.mxu0 0.0
    %797 = vmatpush1.msra.mxu0 0.0
    %798 = vmatprep.subr.mxu0 0.0
    %799 = vmatpush1.msra.mxu0 0.0
    %800 = vmatprep.subr.mxu0 0.0
    %801 = vmatpush1.msra.mxu0 0.0
    %802 = vmatprep.subr.mxu0 0.0
    %803 = vmatpush1.msra.mxu0 0.0
    %804 = vmatprep.subr.mxu0 0.0
    %805 = vmatpush1.msra.mxu0 0.0
    %806 = vmatprep.subr.mxu0 0.0
    %807 = vmatpush1.msra.mxu0 0.0
    %808 = vmatprep.subr.mxu0 0.0
    %809 = vmatpush1.msra.mxu0 0.0
    %810 = vmatprep.subr.mxu0 0.0
    %811 = vmatpush1.msra.mxu0 0.0
    %812 = vmatprep.subr.mxu0 0.0
    %813 = vmatpush1.msra.mxu0 0.0
    %814 = vmatprep.subr.mxu0 0.0
    %815 = vmatpush1.msra.mxu0 0.0
    %816 = vmatprep.subr.mxu0 0.0
    %817 = vmatpush1.msra.mxu0 0.0
    %818 = vmatprep.mubr.f32.mxu0 0.0
    %819 = vmatmul.mubr.f32.gmra.mrb[0].mxu0 %v730
    %v820 = vpop.f32.mrb[0].mxu0
    %v821 = vadd.f32 %v752, %v820
    %v822 = vpop.f32.mrb[0].mxu0
    %823 = vdwg.mxu0
    %v824 = vxor.u32 %v821, 2147483648
    %v825 = vmul.f32 %v824, 1.442695
    %v826 = vpow.pop %v825
    %v827 = vadd.f32 %v826, 1.0
    %v828 = vrcp.pop %v827
    %v829 = vmul.f32 1.0, %v828
    %v830 = vmul.f32 %v829, 10.0
    %831 = vst [vmem:[%s9] sm:$0xff] %v830
    // Predicated region
    $region62: #{audio_analysis_forward.1} parent=1 // pred_check
      _
    $region63: #{audio_analysis_forward.1} parent=1 // pred_check_branch
      %833 = sbr.rel (0) target = $region65
    $region64: #{audio_analysis_forward.1} parent=1 // pred_region
      _
    $region65: #{audio_analysis_forward.1} parent=1 // pred_fallthru
      _
    // Predicated region
    $region66: #{audio_analysis_forward.1} parent=1 // pred_check
      _
    $region67: #{audio_analysis_forward.1} parent=1 // pred_check_branch
      %835 = sbr.rel (0) target = $region69
    $region68: #{audio_analysis_forward.1} parent=1 // pred_region
      _
    $region69: #{audio_analysis_forward.1} parent=1 // pred_fallthru
      _
    %836 = vsyncpa [#allocation3], 1
    %837 = vsyncpa [#allocation5], 1
    %838 = vsyncpa [#allocation8], 1
    %839 = vsyncpa [#allocation11], 1

</llo_original>
